<compile_context>
chip_gen: v6e
topology: v6e:2x2x1
jax: 0.10.0
libtpu: 0.0.40
codegen_flags: <defaults>
</compile_context>

<pallas_src>
import functools

import jax
import jax.numpy as jnp
from jax.experimental import pallas as pl
from jax.experimental.pallas import tpu as pltpu


# ----------------------------------------------------------------------------
# Helpers
# ----------------------------------------------------------------------------
def _resident(shape):
    """Whole-array-in-VMEM BlockSpec (constant index map, DMA'd once)."""
    zeros = (0,) * len(shape)
    return pl.BlockSpec(shape, lambda *_: zeros)


def _vmem_limit_bytes():
    try:
        cap = pltpu.get_tpu_info().vmem_capacity_bytes
    except Exception:  # pragma: no cover - conservative fallback
        cap = 128 * 1024 * 1024
    # leave headroom for double buffers / compiler scratch:
    #   v7x (64 MiB) -> 48 MiB ; v5e/v6e (128 MiB) -> 96 MiB
    return int(max(32 * 1024 * 1024, min(cap * 3 // 4, 112 * 1024 * 1024)))


def _pick_edge_rows(v, h, bytes_per=4, target=2 * 1024 * 1024):
    """Rows per (rows, V, H) edge block; must divide V so blocks never straddle a batch."""
    cands = [r for r in range(1, v + 1) if v % r == 0 and r * v * h * bytes_per <= target]
    return max(cands) if cands else 1


def _pick_flat_rows(n, h, bytes_per=4, target=2 * 1024 * 1024):
    """Rows per (rows, H) block for the head; multiple of 8 and a divisor of n."""
    cands = [r for r in range(8, n + 1, 8) if n % r == 0 and r * h * bytes_per <= target]
    return max(cands) if cands else n


# ----------------------------------------------------------------------------
# Kernel 1: input embeddings (node linear + edge-capacity embedding), gridded
# ----------------------------------------------------------------------------
def embed_kernel(scal_ref, cap_ref, xn_ref, wnode_ref, wedge_ref, x0_ref, e0_ref):
    i = pl.program_id(0)

    @pl.when(i == 0)
    def _():
        B, V, C = xn_ref.shape
        H = wnode_ref.shape[1]
        xf = xn_ref[...].reshape(B * V, C)
        x0_ref[...] = jnp.dot(xf, wnode_ref[...],
                              preferred_element_type=jnp.float32).reshape(B, V, H)

    cmin = scal_ref[0]
    inv_span = scal_ref[1]
    ncap = (cap_ref[...] - cmin) * inv_span                      # (rows, V)
    we = wedge_ref[...]                                          # (1, H)
    e0_ref[...] = ncap[:, :, None] * we.reshape(1, 1, -1)        # (rows, V, H)


# ----------------------------------------------------------------------------
# Kernel 2: one residual gated GCN layer, grid = (pass, batch, row_block)
# ----------------------------------------------------------------------------
def gcn_layer_kernel(x_ref, e_ref,
                     wue_ref, bue_ref, wve_ref, bve_ref,
                     wun_ref, bun_ref, wvn_ref, bvn_ref,
                     bng_ref, bnb_ref, beg_ref, beb_ref,
                     x_out_ref, e_out_ref,
                     vxe_scr, vxn_scr, xtmp_scr,
                     emean_scr, em2_scr, se_scr, he_scr,
                     *, rows, mean_agg):
    p = pl.program_id(0)
    b = pl.program_id(1)
    i = pl.program_id(2)
    ni = pl.num_programs(2)

    B, V, H = x_ref.shape
    eps = 1e-5

    # ---- one-time node-side matmuls + stats init (very first grid step) ------
    @pl.when((p == 0) & (b == 0) & (i == 0))
    def _init():
        xf = x_ref[...].reshape(B * V, H)
        vxe_scr[...] = jnp.dot(xf, wve_ref[...],
                               preferred_element_type=jnp.float32) + bve_ref[...]
        vxn_scr[...] = jnp.dot(xf, wvn_ref[...],
                               preferred_element_type=jnp.float32) + bvn_ref[...]
        xtmp_scr[...] = jnp.dot(xf, wun_ref[...],
                                preferred_element_type=jnp.float32) + bun_ref[...]
        emean_scr[...] = jnp.zeros_like(emean_scr)
        em2_scr[...] = jnp.zeros_like(em2_scr)

    # ---- recompute e_tmp for this (rows, V, H) block (needed in both passes) --
    row0 = pl.multiple_of(b * V + i * rows, rows)   # first row-node of this block
    col0 = pl.multiple_of(b * V, V)                 # first col-node of this batch
    e_blk = e_ref[...]                              # (rows, V, H)
    ue = jnp.dot(e_blk.reshape(rows * V, H), wue_ref[...],
                 preferred_element_type=jnp.float32) + bue_ref[...]
    vxe_i = vxe_scr[pl.ds(row0, rows), :]           # (rows, H)
    vxe_j = vxe_scr[pl.ds(col0, V), :]              # (V, H)
    e_tmp = ue.reshape(rows, V, H) + vxe_i[:, None, :] + vxe_j[None, :, :]

    # ---- pass 0: gated aggregation into x_tmp + streaming edge-BN stats ------
    @pl.when(p == 0)
    def _pass0():
        gate = 0.5 * (jnp.tanh(0.5 * e_tmp) + 1.0)          # sigmoid, 1 EUP op
        vxn_j = vxn_scr[pl.ds(col0, V), :]
        num = jnp.sum(gate * vxn_j[None, :, :], axis=1)     # (rows, H)
        if mean_agg:
            num = num / (1e-20 + jnp.sum(gate, axis=1))
        xtmp_scr[pl.ds(row0, rows), :] = xtmp_scr[pl.ds(row0, rows), :] + num

        # Chan/Welford combine of per-block centered stats (per channel)
        ef = e_tmp.reshape(rows * V, H)
        n2 = float(rows * V)
        mu2 = jnp.sum(ef, axis=0, keepdims=True) * (1.0 / n2)
        d2 = ef - mu2
        m2b = jnp.sum(d2 * d2, axis=0, keepdims=True)
        n1 = ((b * ni + i) * (rows * V)).astype(jnp.float32)
        tot = n1 + n2
        delta = mu2 - emean_scr[...]
        emean_scr[...] = emean_scr[...] + delta * (n2 / tot)
        em2_scr[...] = em2_scr[...] + m2b + (delta * delta) * (n1 * n2 / tot)

    # ---- pass-1 prologue: finalize BN scale/shift + node update (once) -------
    @pl.when((p == 1) & (b == 0) & (i == 0))
    def _finalize():
        inv_ne = 1.0 / float(B * V * V)
        var_e = em2_scr[...] * inv_ne
        se = beg_ref[...] * jax.lax.rsqrt(var_e + eps)
        se_scr[...] = se
        he_scr[...] = beb_ref[...] - emean_scr[...] * se

        xt = xtmp_scr[...]                                   # (B*V, H)
        inv_nn = 1.0 / float(B * V)
        mu_n = jnp.sum(xt, axis=0, keepdims=True) * inv_nn
        dn = xt - mu_n
        var_n = jnp.sum(dn * dn, axis=0, keepdims=True) * inv_nn
        sn = bng_ref[...] * jax.lax.rsqrt(var_n + eps)
        hn = bnb_ref[...] - mu_n * sn
        x_out_ref[...] = (x_ref[...].reshape(B * V, H)
                          + jnp.maximum(xt * sn + hn, 0.0)).reshape(B, V, H)

    # ---- pass 1: normalize + ReLU + residual, stream e_out block -------------
    @pl.when(p == 1)
    def _pass1():
        ef = e_tmp.reshape(rows * V, H)
        e_new = (e_blk.reshape(rows * V, H)
                 + jnp.maximum(ef * se_scr[...] + he_scr[...], 0.0))
        e_out_ref[...] = e_new.reshape(rows, V, H)


# ----------------------------------------------------------------------------
# Kernel 3: edge MLP head + log_softmax + class-weighted NLL, gridded over edges
# ----------------------------------------------------------------------------
def edge_head_kernel(e_ref, y_ref, wu_ref, bu_ref, wvt_ref, bv_ref, cw_ref,
                     ypred_ref, loss_ref, acc_ref, *, n_hidden):
    j = pl.program_id(0)
    nj = pl.num_programs(0)

    @pl.when(j == 0)
    def _():
        acc_ref[0] = jnp.float32(0.0)
        acc_ref[1] = jnp.float32(0.0)

    h = e_ref[...]                                           # (ner, H)
    for l in range(n_hidden):                                # static, small
        h = jnp.maximum(
            jnp.dot(h, wu_ref[l], preferred_element_type=jnp.float32) + bu_ref[l],
            0.0)

    wvt = wvt_ref[...]                                       # (O, H)
    bv = bv_ref[...]                                         # (1, O)
    O = wvt.shape[0]
    # per-class lane reduce: no (O, ner, H) broadcast temporary
    cols = [jnp.sum(h * wvt[c][None, :], axis=-1, keepdims=True) + bv[0, c]
            for c in range(O)]
    logits = jnp.concatenate(cols, axis=1)                   # (ner, O)
    ypred_ref[...] = logits

    # log_softmax over classes + class-weighted NLL accumulation
    m = jnp.max(logits, axis=1, keepdims=True)
    z = logits - m
    logp = z - jnp.log(jnp.sum(jnp.exp(z), axis=1, keepdims=True))
    y = y_ref[...]                                           # (ner, 1) int32
    classes = jax.lax.broadcasted_iota(jnp.int32, logits.shape, 1)
    onehot = (classes == y).astype(jnp.float32)
    w = jnp.sum(onehot * cw_ref[...], axis=1, keepdims=True)             # (ner, 1)
    nll = -jnp.sum(onehot * logp, axis=1, keepdims=True)                 # (ner, 1)
    acc_ref[0] = acc_ref[0] + jnp.sum(w * nll)
    acc_ref[1] = acc_ref[1] + jnp.sum(w)

    @pl.when(j == nj - 1)
    def _():
        loss_ref[0] = acc_ref[0] / acc_ref[1]


# ----------------------------------------------------------------------------
# Wrapper
# ----------------------------------------------------------------------------
def model_forward(params, x_edges, x_edges_capacity, x_nodes, y_edges, edge_cw,
                  aggregation):
    # x_edges is unused numerically in the reference forward (kept for API parity).
    del x_edges
    B, V, _ = x_edges_capacity.shape
    C = x_nodes.shape[-1]
    H = params["w_node"].shape[1]
    O = params["mlp_wv"].shape[1]
    Ne = B * V * V

    vmem_limit = _vmem_limit_bytes()

    def cparams(sem):
        return pltpu.CompilerParams(dimension_semantics=sem,
                                    vmem_limit_bytes=vmem_limit)

    # --- capacity min/max hoisted out of the kernels (SMEM scalars) -----------
    cmin = jnp.min(x_edges_capacity)
    cmax = jnp.max(x_edges_capacity)
    span = cmax - cmin
    inv_span = jnp.where(span > 0, 1.0 / span, 0.0)   # guard (reference NaNs here)
    scal = jnp.stack([cmin, inv_span]).astype(jnp.float32)       # (2,)

    rows = _pick_edge_rows(V, H)
    ni = V // rows
    nb = (B * V) // rows
    cap2 = x_edges_capacity.reshape(B * V, V).astype(jnp.float32)

    # --- input embeddings ------------------------------------------------------
    x, e = pl.pallas_call(
        embed_kernel,
        grid=(nb,),
        out_shape=(jax.ShapeDtypeStruct((B, V, H), jnp.float32),
                   jax.ShapeDtypeStruct((B * V, V, H), jnp.float32)),
        in_specs=[pl.BlockSpec(memory_space=pltpu.MemorySpace.SMEM),
                  pl.BlockSpec((rows, V), lambda i: (i, 0)),
                  _resident((B, V, C)),
                  _resident((C, H)),
                  _resident((1, H))],
        out_specs=(pl.BlockSpec((B, V, H), lambda i: (0, 0, 0)),
                   pl.BlockSpec((rows, V, H), lambda i: (i, 0, 0))),
        compiler_params=cparams(("arbitrary",)),
    )(scal, cap2, x_nodes.astype(jnp.float32), params["w_node"], params["w_edge"])

    # --- residual gated GCN layers (stats pass + normalize pass per layer) -----
    mean_agg = (aggregation == "mean")
    layer_kernel = functools.partial(gcn_layer_kernel, rows=rows, mean_agg=mean_agg)
    for lp in params["layers"]:
        x, e = pl.pallas_call(
            layer_kernel,
            grid=(2, B, ni),
            out_shape=(jax.ShapeDtypeStruct((B, V, H), jnp.float32),
                       jax.ShapeDtypeStruct((B * V, V, H), jnp.float32)),
            in_specs=[
                _resident((B, V, H)),                                      # x
                pl.BlockSpec((rows, V, H), lambda p, b, i: (b * ni + i, 0, 0)),  # e
                _resident((H, H)), _resident((1, H)),                      # U_e
                _resident((H, H)), _resident((1, H)),                      # V_e
                _resident((H, H)), _resident((1, H)),                      # U_n
                _resident((H, H)), _resident((1, H)),                      # V_n
                _resident((1, H)), _resident((1, H)),                      # node BN
                _resident((1, H)), _resident((1, H)),                      # edge BN
            ],
            out_specs=(
                pl.BlockSpec((B, V, H), lambda p, b, i: (0, 0, 0)),
                # pass 0 maps every step to block 0 (stays resident, never flushed
                # until pass 1 has written it) -> e_out only streamed once.
                pl.BlockSpec((rows, V, H), lambda p, b, i: ((b * ni + i) * p, 0, 0)),
            ),
            scratch_shapes=[
                pltpu.VMEM((B * V, H), jnp.float32),   # V_e * x
                pltpu.VMEM((B * V, H), jnp.float32),   # V_n * x
                pltpu.VMEM((B * V, H), jnp.float32),   # x_tmp (U_n*x + agg)
                pltpu.VMEM((1, H), jnp.float32),       # running edge mean
                pltpu.VMEM((1, H), jnp.float32),       # running edge M2
                pltpu.VMEM((1, H), jnp.float32),       # edge BN scale
                pltpu.VMEM((1, H), jnp.float32),       # edge BN shift
            ],
            compiler_params=cparams(("arbitrary", "arbitrary", "arbitrary")),
        )(x, e, lp["wue"], lp["bue"], lp["wve"], lp["bve"],
          lp["wun"], lp["bun"], lp["wvn"], lp["bvn"],
          lp["bn_node_g"], lp["bn_node_b"], lp["bn_edge_g"], lp["bn_edge_b"])

    # --- edge MLP head + weighted NLL ------------------------------------------
    ner = _pick_flat_rows(Ne, H)
    nj = Ne // ner
    e_flat = e.reshape(Ne, H)
    y_flat = y_edges.reshape(Ne, 1).astype(jnp.int32)
    cw = edge_cw.reshape(1, O).astype(jnp.float32)
    mlp_wvt = params["mlp_wv"].T                      # (O, H)
    mlp_bv = params["mlp_bv"].reshape(1, O)
    n_hidden = params["mlp_wu"].shape[0]

    head_kernel = functools.partial(edge_head_kernel, n_hidden=n_hidden)
    y_pred_flat, loss = pl.pallas_call(
        head_kernel,
        grid=(nj,),
        out_shape=(jax.ShapeDtypeStruct((Ne, O), jnp.float32),
                   jax.ShapeDtypeStruct((1,), jnp.float32)),
        in_specs=[
            pl.BlockSpec((ner, H), lambda j: (j, 0)),
            pl.BlockSpec((ner, 1), lambda j: (j, 0)),
            _resident((n_hidden, H, H)),
            _resident((n_hidden, 1, H)),
            _resident((O, H)),
            _resident((1, O)),
            _resident((1, O)),
        ],
        out_specs=(pl.BlockSpec((ner, O), lambda j: (j, 0)),
                   pl.BlockSpec(memory_space=pltpu.MemorySpace.SMEM)),
        scratch_shapes=[pltpu.SMEM((2,), jnp.float32)],
        compiler_params=cparams(("arbitrary",)),
    )(e_flat, y_flat, params["mlp_wu"], params["mlp_bu"], mlp_wvt, mlp_bv, cw)

    y_pred = y_pred_flat.reshape(B, V, V, O)          # layout plumbing only
    return y_pred, loss[0]


# ----------------------------------------------------------------------------
# Pure-JAX reference (correctness check only)
# ----------------------------------------------------------------------------
def reference_forward(params, x_edges_capacity, x_nodes, y_edges, edge_cw, aggregation):
    cmin, cmax = x_edges_capacity.min(), x_edges_capacity.max()
    ncap = (x_edges_capacity - cmin) / (cmax - cmin)
    H = params["w_node"].shape[1]
    x = x_nodes @ params["w_node"]
    e = ncap[..., None] * params["w_edge"].reshape(1, 1, 1, H)
    eps = 1e-5
    for p in params["layers"]:
        Ue = e @ p["wue"] + p["bue"]
        Vxe = x @ p["wve"] + p["bve"]
        e_tmp = Ue + Vxe[:, :, None, :] + Vxe[:, None, :, :]
        gate = jax.nn.sigmoid(e_tmp)
        Ux = x @ p["wun"] + p["bun"]
        Vxn = x @ p["wvn"] + p["bvn"]
        agg = (gate * Vxn[:, None, :, :]).sum(2)
        if aggregation == "mean":
            agg = agg / (1e-20 + gate.sum(2))
        x_tmp = Ux + agg
        mu_e = e_tmp.mean((0, 1, 2)); var_e = ((e_tmp - mu_e) ** 2).mean((0, 1, 2))
        e_bn = (e_tmp - mu_e) / jnp.sqrt(var_e + eps) * p["bn_edge_g"][0] + p["bn_edge_b"][0]
        mu_n = x_tmp.mean((0, 1)); var_n = ((x_tmp - mu_n) ** 2).mean((0, 1))
        x_bn = (x_tmp - mu_n) / jnp.sqrt(var_n + eps) * p["bn_node_g"][0] + p["bn_node_b"][0]
        x = x + jnp.maximum(x_bn, 0.0)
        e = e + jnp.maximum(e_bn, 0.0)
    h = e
    for l in range(params["mlp_wu"].shape[0]):
        h = jnp.maximum(h @ params["mlp_wu"][l] + params["mlp_bu"][l], 0.0)
    logits = h @ params["mlp_wv"] + params["mlp_bv"]
    logp = jax.nn.log_softmax(logits, axis=-1)
    O = logits.shape[-1]
    onehot = jax.nn.one_hot(y_edges, O, dtype=jnp.float32)
    w = (onehot * edge_cw.reshape(1, 1, 1, O)).sum(-1)
    nll = -(onehot * logp).sum(-1)
    loss = (w * nll).sum() / w.sum()
    return logits, loss


# ----------------------------------------------------------------------------
# Deterministic parameter init + run
# ----------------------------------------------------------------------------
def init_linear(key, fan_in, fan_out, bias=True):
    kw, kb = jax.random.split(key)
    bound = 1.0 / jnp.sqrt(jnp.float32(fan_in))
    w = jax.random.uniform(kw, (fan_in, fan_out), jnp.float32, -bound, bound)
    if not bias:
        return w
    b = jax.random.uniform(kb, (1, fan_out), jnp.float32, -bound, bound)
    return w, b


if __name__ == "__main__":
    # config: num_nodes=8, num_commodities=4, hidden_dim=32, num_layers=2,
    # mlp_layers=2, voc_edges_out=2, aggregation="mean"
    B, V, C, H = 2, 8, 4, 32
    NUM_LAYERS = 2
    MLP_LAYERS = 2
    VOC_EDGES_OUT = 2
    AGG = "mean"

    root = jax.random.PRNGKey(0)
    keys = iter(jax.random.split(root, 64))

    params = {
        "w_node": init_linear(next(keys), C, H, bias=False),   # nodes_commodity_embedding
        "w_edge": init_linear(next(keys), 1, H, bias=False),   # edges_values_embedding
        "layers": [],
    }
    for _ in range(NUM_LAYERS):
        wue, bue = init_linear(next(keys), H, H)
        wve, bve = init_linear(next(keys), H, H)
        wun, bun = init_linear(next(keys), H, H)
        wvn, bvn = init_linear(next(keys), H, H)
        params["layers"].append(dict(
            wue=wue, bue=bue, wve=wve, bve=bve,
            wun=wun, bun=bun, wvn=wvn, bvn=bvn,
            bn_node_g=jnp.ones((1, H), jnp.float32), bn_node_b=jnp.zeros((1, H), jnp.float32),
            bn_edge_g=jnp.ones((1, H), jnp.float32), bn_edge_b=jnp.zeros((1, H), jnp.float32),
        ))
    # MLP: (mlp_layers - 1) hidden layers + output layer
    wu_list, bu_list = [], []
    for _ in range(MLP_LAYERS - 1):
        w, b = init_linear(next(keys), H, H)
        wu_list.append(w); bu_list.append(b)
    params["mlp_wu"] = jnp.stack(wu_list)            # (L-1, H, H)
    params["mlp_bu"] = jnp.stack(bu_list)            # (L-1, 1, H)
    params["mlp_wv"], params["mlp_bv"] = init_linear(next(keys), H, VOC_EDGES_OUT)

    # inputs
    x_edges = jax.random.randint(next(keys), (B, V, V), 0, 2).astype(jnp.int32)
    x_edges_capacity = jax.random.uniform(next(keys), (B, V, V), jnp.float32, 0.0, 10.0)
    x_nodes = jax.random.uniform(next(keys), (B, V, C), jnp.float32, -1.0, 1.0)
    y_edges = jax.random.randint(next(keys), (B, V, V), 0, VOC_EDGES_OUT).astype(jnp.int32)
    edge_cw = jnp.array([[1.0, 3.0]], dtype=jnp.float32)   # (1, voc_edges_out)

    y_pred, loss = model_forward(params, x_edges, x_edges_capacity, x_nodes,
                                 y_edges, edge_cw, AGG)
    y_pred = jax.block_until_ready(y_pred)
    loss = jax.block_until_ready(loss)

    # sanity check against pure-JAX reference
    y_ref, loss_ref = reference_forward(params, x_edges_capacity, x_nodes,
                                        y_edges, edge_cw[0], AGG)
    assert y_pred.shape == (B, V, V, VOC_EDGES_OUT)
    assert jnp.allclose(y_pred, y_ref, rtol=2e-3, atol=2e-3)
    assert jnp.allclose(loss, loss_ref, rtol=2e-3, atol=2e-3)
    assert bool(jnp.isfinite(loss))

    print("KERNEL_OK")
</pallas_src>

<mosaic_0001>
module attributes {stable_mosaic.version = 11 : i64} {
  func.func @embed_kernel(%arg0: i32, %arg1: memref<2xf32, #tpu.memory_space<smem>>, %arg2: memref<8x8xf32, #tpu.memory_space<vmem>>, %arg3: memref<2x8x4xf32, #tpu.memory_space<vmem>>, %arg4: memref<4x32xf32, #tpu.memory_space<vmem>>, %arg5: memref<1x32xf32, #tpu.memory_space<vmem>>, %arg6: memref<2x8x32xf32, #tpu.memory_space<vmem>>, %arg7: memref<8x8x32xf32, #tpu.memory_space<vmem>>) attributes {dimension_semantics = [#tpu.dimension_semantics<arbitrary>], iteration_bounds = array<i64: 2>, scalar_prefetch = 0 : i64, scratch_operands = 0 : i64, tpu.core_type = #tpu.core_type<tc>, window_params = [{transform_indices = @transform_0, window_bounds = array<i64: 2>}, {transform_indices = @transform_1, window_bounds = array<i64: 8, 8>}, {pipeline_mode = #tpu.pipeline_mode<synchronous>, transform_indices = @transform_2, window_bounds = array<i64: 2, 8, 4>}, {pipeline_mode = #tpu.pipeline_mode<synchronous>, transform_indices = @transform_3, window_bounds = array<i64: 4, 32>}, {pipeline_mode = #tpu.pipeline_mode<synchronous>, transform_indices = @transform_4, window_bounds = array<i64: 1, 32>}, {pipeline_mode = #tpu.pipeline_mode<synchronous>, transform_indices = @transform_5, window_bounds = array<i64: 2, 8, 32>}, {transform_indices = @transform_6, window_bounds = array<i64: 8, 8, 32>}]} {
    %c0_i32 = arith.constant 0 : i32
    %0 = arith.cmpi eq, %arg0, %c0_i32 : i32
    %1 = arith.extui %0 : i1 to i32
    %c0_i32_0 = arith.constant 0 : i32
    %2 = arith.cmpi ne, %1, %c0_i32_0 : i32
    scf.if %2 {
      %c0_8 = arith.constant 0 : index
      %c0_9 = arith.constant 0 : index
      %c0_10 = arith.constant 0 : index
      %17 = vector.load %arg3[%c0_8, %c0_9, %c0_10] : memref<2x8x4xf32, #tpu.memory_space<vmem>>, vector<2x8x4xf32>
      %18 = vector.shape_cast %17 : vector<2x8x4xf32> to vector<16x4xf32>
      %c0_11 = arith.constant 0 : index
      %c0_12 = arith.constant 0 : index
      %19 = vector.load %arg4[%c0_11, %c0_12] : memref<4x32xf32, #tpu.memory_space<vmem>>, vector<4x32xf32>
      %cst = arith.constant dense<0.000000e+00> : vector<16x32xf32>
      %20 = tpu.matmul %18, %19, %cst {dimension_numbers = #tpu.dot_dimension_numbers<[1], [0], [0], [1], [0, 0, 1, 1], [], []>} : vector<16x4xf32>, vector<4x32xf32>, vector<16x32xf32> -> vector<16x32xf32>
      %21 = vector.shape_cast %20 : vector<16x32xf32> to vector<2x8x32xf32>
      %c0_13 = arith.constant 0 : index
      %c0_14 = arith.constant 0 : index
      %c0_15 = arith.constant 0 : index
      %22 = vector.load %arg6[%c0_13, %c0_14, %c0_15] : memref<2x8x32xf32, #tpu.memory_space<vmem>>, vector<2x8x32xf32>
      tpu.vector_store %arg6[%c0_13, %c0_14, %c0_15], %21 {strides = array<i32>} : memref<2x8x32xf32, #tpu.memory_space<vmem>>, vector<2x8x32xf32>,
    } else {
    }
    %c0 = arith.constant 0 : index
    %3 = memref.load %arg1[%c0] : memref<2xf32, #tpu.memory_space<smem>>
    %c1 = arith.constant 1 : index
    %4 = memref.load %arg1[%c1] : memref<2xf32, #tpu.memory_space<smem>>
    %c0_1 = arith.constant 0 : index
    %c0_2 = arith.constant 0 : index
    %5 = vector.load %arg2[%c0_1, %c0_2] : memref<8x8xf32, #tpu.memory_space<vmem>>, vector<8x8xf32>
    %6 = vector.broadcast %3 : f32 to vector<8x8xf32>
    %7 = arith.subf %5, %6 : vector<8x8xf32>
    %8 = vector.broadcast %4 : f32 to vector<8x8xf32>
    %9 = arith.mulf %7, %8 : vector<8x8xf32>
    %c0_3 = arith.constant 0 : index
    %c0_4 = arith.constant 0 : index
    %10 = vector.load %arg5[%c0_3, %c0_4] : memref<1x32xf32, #tpu.memory_space<vmem>>, vector<1x32xf32>
    %11 = vector.shape_cast %9 : vector<8x8xf32> to vector<8x8x1xf32>
    %12 = vector.shape_cast %10 : vector<1x32xf32> to vector<1x1x32xf32>
    %13 = vector.broadcast %11 : vector<8x8x1xf32> to vector<8x8x32xf32>
    %14 = vector.broadcast %12 : vector<1x1x32xf32> to vector<8x8x32xf32>
    %15 = arith.mulf %13, %14 : vector<8x8x32xf32>
    %c0_5 = arith.constant 0 : index
    %c0_6 = arith.constant 0 : index
    %c0_7 = arith.constant 0 : index
    %16 = vector.load %arg7[%c0_5, %c0_6, %c0_7] : memref<8x8x32xf32, #tpu.memory_space<vmem>>, vector<8x8x32xf32>
    tpu.vector_store %arg7[%c0_5, %c0_6, %c0_7], %15 {strides = array<i32>} : memref<8x8x32xf32, #tpu.memory_space<vmem>>, vector<8x8x32xf32>,
    return
  }
  func.func @transform_0(%arg0: i32) -> i32 {
    %c0_i32 = arith.constant 0 : i32
    %c0_i32_0 = arith.constant 0 : i32
    return %c0_i32 : i32
  }
  func.func @transform_1(%arg0: i32) -> (i32, i32) {
    %c0_i32 = arith.constant 0 : i32
    %c0_i32_0 = arith.constant 0 : i32
    return %arg0, %c0_i32 : i32, i32
  }
  func.func @transform_2(%arg0: i32) -> (i32, i32, i32) {
    %c0_i32 = arith.constant 0 : i32
    %c0_i32_0 = arith.constant 0 : i32
    %c0_i32_1 = arith.constant 0 : i32
    %c0_i32_2 = arith.constant 0 : i32
    return %c0_i32, %c0_i32_0, %c0_i32_1 : i32, i32, i32
  }
  func.func @transform_3(%arg0: i32) -> (i32, i32) {
    %c0_i32 = arith.constant 0 : i32
    %c0_i32_0 = arith.constant 0 : i32
    %c0_i32_1 = arith.constant 0 : i32
    return %c0_i32, %c0_i32_0 : i32, i32
  }
  func.func @transform_4(%arg0: i32) -> (i32, i32) {
    %c0_i32 = arith.constant 0 : i32
    %c0_i32_0 = arith.constant 0 : i32
    %c0_i32_1 = arith.constant 0 : i32
    return %c0_i32, %c0_i32_0 : i32, i32
  }
  func.func @transform_5(%arg0: i32) -> (i32, i32, i32) {
    %c0_i32 = arith.constant 0 : i32
    %c0_i32_0 = arith.constant 0 : i32
    %c0_i32_1 = arith.constant 0 : i32
    %c0_i32_2 = arith.constant 0 : i32
    return %c0_i32, %c0_i32_0, %c0_i32_1 : i32, i32, i32
  }
  func.func @transform_6(%arg0: i32) -> (i32, i32, i32) {
    %c0_i32 = arith.constant 0 : i32
    %c0_i32_0 = arith.constant 0 : i32
    %c0_i32_1 = arith.constant 0 : i32
    return %arg0, %c0_i32, %c0_i32_0 : i32, i32, i32
  }
}

</mosaic_0001>

<llo_original>
// kernel: tpu_custom_call.1
$region0: #{tpu_custom_call.1}
  #allocation0 [shape = 'u32[]', space=smem, size = 0x4, offset = 0x4, fixed_abs, tag = 'smem constant byte address 0x4 - core index']
  #allocation1 [shape = 'u32[144,128]{1,0:T(1,128)}', space=vmem, size = 0x12000, scoped, tag = 'internal scratch']
  %s0 = inlined_call_operand.vmem [shape: f32[2], index: 0, kind: input, shape index: {}]
  %s1 = inlined_call_operand.vmem [shape: f32[16,8], index: 1, kind: input, shape index: {}]
  %s2 = inlined_call_operand.vmem [shape: f32[2,8,4], index: 2, kind: input, shape index: {}]
  %s3 = inlined_call_operand.vmem [shape: f32[4,32], index: 3, kind: input, shape index: {}]
  %s4 = inlined_call_operand.vmem [shape: f32[1,32], index: 4, kind: input, shape index: {}]
  %s5 = inlined_call_operand.hbm [shape: f32[2,8,32], index: 5, kind: output, shape index: {0}]
  %s6 = inlined_call_operand.hbm [shape: f32[16,8,32], index: 6, kind: output, shape index: {1}]
  %7 = xla_tuple %s5, %s6
  %s8 = sld [smem:[#allocation0]]
  $region69: #{tpu_custom_call.1} parent=0
    _
  %s10 = ssub.s32 1, %s8
  %s11 = scalar_select 0, %s10, %s8
  $region1: #{tpu_custom_call.1} parent=0
    #allocation2 [shape = 'u8[512]{0}', space=smem, size = 0x200, scoped, tag = 'input window, operand 0, single buffered']
    #allocation3 [shape = 's32[2]{0}', space=sflag, size = 0x8, scoped, tag = 'scoped memory for tpu_custom_call.1']
    #allocation4 [shape = 's32[2]{0}', space=sflag, size = 0x8, scoped, tag = 'scoped memory for tpu_custom_call.1']
    #allocation5 [shape = 'u8[8192]{0}', space=vmem, size = 0x2000, scoped, tag = 'output window, operand 0, single buffered']
    #allocation6 [shape = 'u8[65536]{0}', space=vmem, size = 0x10000, scoped, tag = 'output window, operand 1']
    #allocation7 [shape = 's32[2]{0}', space=sflag, size = 0x8, scoped, tag = 'scoped memory for tpu_custom_call.1']
    %12 = vsyncpa [#allocation4], 0
    %13 = vsyncpa [#allocation3], 0
    %14 = vsyncpa [#allocation7], 0
    %s15 = scalar_lea.sflag [#allocation7], 1
    %16 = vsyncpa %s15, 0
    loop: start=0, step=1, limit=4
    $region2: #{tpu_custom_call.1} parent=1 // loop_pre_header
      _
    $region3: #{tpu_custom_call.1} parent=1 // loop_header
      %s18 = sphi 0, %s22
      %p19 = scmp.ge.s32.totalorder %s18, 4
      %s26 = sphi 0, %s26
      %s28 = sphi 0, %s26
      %s29 = sphi 0, %s28
      %s43 = sphi 0, %s29
      %s49 = sphi 0, %s51
      %s52 = sphi 0, %s49
      %s53 = sphi 0, %s52
      %s69 = sphi 0, %s53
      %s73 = sphi 0, %s73
      %s75 = sphi 0, %s73
      %s76 = sphi 0, %s75
      %s90 = sphi 0, %s76
      %s94 = sphi 0, %s94
      %s96 = sphi 0, %s94
      %s97 = sphi 0, %s96
      %s111 = sphi 0, %s97
      %s115 = sphi 0, %s115
      %s117 = sphi 0, %s115
      %s118 = sphi 0, %s117
      %s132 = sphi 0, %s118
      %s136 = sphi 0, %s136
      %s138 = sphi 0, %s136
      %s139 = sphi 0, %s138
      %s153 = sphi 0, %s139
      %s159 = sphi 0, %s161
      %s162 = sphi 0, %s159
      %s163 = sphi 0, %s162
      %s179 = sphi 0, %s163
    $region4: #{tpu_custom_call.1} parent=1 // loop_header_branch
      %21 = sbr.rel (%p19) target = $region8
    $region5: #{tpu_custom_call.1} parent=1 // loop_body
      %s23 = ssub.s32 %s18, 1
      %s24 = ssub.s32 %s18, 2
      %s25 = sadd.s32 %s18, 1
      %s27 = sadd.s32 %s26, 1
      %p30 = scmp.eq.s32.totalorder %s18, 1
      %p31 = scmp.ne.s32.totalorder %s26, %s28
      %p32 = scmp.eq.s32.totalorder %s18, 0
      %p33 = por %p31, %p32
      %p34 = scmp.ne.s32.totalorder %s26, %s28
      %p35 = scmp.eq.s32.totalorder %s23, 1
      %p36 = por %p34, %p35
      %p37 = scmp.ne.s32.totalorder %s28, %s29
      %p38 = scmp.eq.s32.totalorder %s23, 0
      %p39 = por %p37, %p38
      %p40 = scmp.ne.s32.totalorder %s28, %s29
      %p41 = scmp.eq.s32.totalorder %s24, 1
      %p42 = por %p40, %p41
      %p44 = scmp.ne.s32.totalorder %s29, %s43
      %p45 = scmp.eq.s32.totalorder %s24, 0
      %p46 = por %p44, %p45
      %s47 = ssub.s32 %s18, %s25
      %p48 = scmp.eq.s32.totalorder %s47, 0
      %s50 = sadd.s32 %s49, 1
      %s51 = scalar_select %p48, %s49, %s50
      %p54 = pneg %p48
      %p55 = scmp.eq.s32.totalorder %s18, 1
      %p56 = por %p54, %p55
      %p57 = scmp.ne.s32.totalorder %s49, %s52
      %p58 = scmp.eq.s32.totalorder %s18, 0
      %p59 = por %p57, %p58
      %p60 = scmp.ne.s32.totalorder %s49, %s52
      %p61 = scmp.eq.s32.totalorder %s23, 1
      %p62 = por %p60, %p61
      %p63 = scmp.ne.s32.totalorder %s52, %s53
      %p64 = scmp.eq.s32.totalorder %s23, 0
      %p65 = por %p63, %p64
      %p66 = scmp.ne.s32.totalorder %s52, %s53
      %p67 = scmp.eq.s32.totalorder %s24, 1
      %p68 = por %p66, %p67
      %p70 = scmp.ne.s32.totalorder %s53, %s69
      %p71 = scmp.eq.s32.totalorder %s24, 0
      %p72 = por %p70, %p71
      %s74 = sadd.s32 %s73, 1
      %p77 = scmp.eq.s32.totalorder %s18, 1
      %p78 = scmp.ne.s32.totalorder %s73, %s75
      %p79 = scmp.eq.s32.totalorder %s18, 0
      %p80 = por %p78, %p79
      %p81 = scmp.ne.s32.totalorder %s73, %s75
      %p82 = scmp.eq.s32.totalorder %s23, 1
      %p83 = por %p81, %p82
      %p84 = scmp.ne.s32.totalorder %s75, %s76
      %p85 = scmp.eq.s32.totalorder %s23, 0
      %p86 = por %p84, %p85
      %p87 = scmp.ne.s32.totalorder %s75, %s76
      %p88 = scmp.eq.s32.totalorder %s24, 1
      %p89 = por %p87, %p88
      %p91 = scmp.ne.s32.totalorder %s76, %s90
      %p92 = scmp.eq.s32.totalorder %s24, 0
      %p93 = por %p91, %p92
      %s95 = sadd.s32 %s94, 1
      %p98 = scmp.eq.s32.totalorder %s18, 1
      %p99 = scmp.ne.s32.totalorder %s94, %s96
      %p100 = scmp.eq.s32.totalorder %s18, 0
      %p101 = por %p99, %p100
      %p102 = scmp.ne.s32.totalorder %s94, %s96
      %p103 = scmp.eq.s32.totalorder %s23, 1
      %p104 = por %p102, %p103
      %p105 = scmp.ne.s32.totalorder %s96, %s97
      %p106 = scmp.eq.s32.totalorder %s23, 0
      %p107 = por %p105, %p106
      %p108 = scmp.ne.s32.totalorder %s96, %s97
      %p109 = scmp.eq.s32.totalorder %s24, 1
      %p110 = por %p108, %p109
      %p112 = scmp.ne.s32.totalorder %s97, %s111
      %p113 = scmp.eq.s32.totalorder %s24, 0
      %p114 = por %p112, %p113
      %s116 = sadd.s32 %s115, 1
      %p119 = scmp.eq.s32.totalorder %s18, 1
      %p120 = scmp.ne.s32.totalorder %s115, %s117
      %p121 = scmp.eq.s32.totalorder %s18, 0
      %p122 = por %p120, %p121
      %p123 = scmp.ne.s32.totalorder %s115, %s117
      %p124 = scmp.eq.s32.totalorder %s23, 1
      %p125 = por %p123, %p124
      %p126 = scmp.ne.s32.totalorder %s117, %s118
      %p127 = scmp.eq.s32.totalorder %s23, 0
      %p128 = por %p126, %p127
      %p129 = scmp.ne.s32.totalorder %s117, %s118
      %p130 = scmp.eq.s32.totalorder %s24, 1
      %p131 = por %p129, %p130
      %p133 = scmp.ne.s32.totalorder %s118, %s132
      %p134 = scmp.eq.s32.totalorder %s24, 0
      %p135 = por %p133, %p134
      %s137 = sadd.s32 %s136, 1
      %p140 = scmp.eq.s32.totalorder %s18, 1
      %p141 = scmp.ne.s32.totalorder %s136, %s138
      %p142 = scmp.eq.s32.totalorder %s18, 0
      %p143 = por %p141, %p142
      %p144 = scmp.ne.s32.totalorder %s136, %s138
      %p145 = scmp.eq.s32.totalorder %s23, 1
      %p146 = por %p144, %p145
      %p147 = scmp.ne.s32.totalorder %s138, %s139
      %p148 = scmp.eq.s32.totalorder %s23, 0
      %p149 = por %p147, %p148
      %p150 = scmp.ne.s32.totalorder %s138, %s139
      %p151 = scmp.eq.s32.totalorder %s24, 1
      %p152 = por %p150, %p151
      %p154 = scmp.ne.s32.totalorder %s139, %s153
      %p155 = scmp.eq.s32.totalorder %s24, 0
      %p156 = por %p154, %p155
      %s157 = ssub.s32 %s18, %s25
      %p158 = scmp.eq.s32.totalorder %s157, 0
      %s160 = sadd.s32 %s159, 1
      %s161 = scalar_select %p158, %s159, %s160
      %p164 = pneg %p158
      %p165 = scmp.eq.s32.totalorder %s18, 1
      %p166 = por %p164, %p165
      %p167 = scmp.ne.s32.totalorder %s159, %s162
      %p168 = scmp.eq.s32.totalorder %s18, 0
      %p169 = por %p167, %p168
      %p170 = scmp.ne.s32.totalorder %s159, %s162
      %p171 = scmp.eq.s32.totalorder %s23, 1
      %p172 = por %p170, %p171
      %p173 = scmp.ne.s32.totalorder %s162, %s163
      %p174 = scmp.eq.s32.totalorder %s23, 0
      %p175 = por %p173, %p174
      %p176 = scmp.ne.s32.totalorder %s162, %s163
      %p177 = scmp.eq.s32.totalorder %s24, 1
      %p178 = por %p176, %p177
      %p180 = scmp.ne.s32.totalorder %s163, %s179
      %p181 = scmp.eq.s32.totalorder %s24, 0
      %p182 = por %p180, %p181
      %p183 = scmp.le.s32.totalorder 1, %s18
      %p184 = scmp.lt.s32.totalorder %s18, 3
      %p185 = pnand %p183, %p184
      %p186 = pneg %p185
      // Predicated region
      $region9: #{tpu_custom_call.1} parent=5 // pred_check
        _
      $region10: #{tpu_custom_call.1} parent=5 // pred_check_branch
        %188 = sbr.rel (%p185) target = $region12
      $region11: #{tpu_custom_call.1} parent=5 // pred_region
        %s189 = ssub.s32 %s18, 1
        // Predicated region
        $region13: #{tpu_custom_call.1} parent=11 // pred_check
          %p190 = pneg %p39
        $region14: #{tpu_custom_call.1} parent=11 // pred_check_branch
          %192 = sbr.rel (%p190) target = $region16
        $region15: #{tpu_custom_call.1} parent=11 // pred_region
          %s194 = ssub.s32 16, 16
          %195 = vsyncadd [#allocation4], %s194
          %s197 = sshll.u32 %s0, 4
          %s198 = int_to_ptr.vmem [resolvable:$true] %s197
          %200 = dma.vmem_to_smem %s198, 16, [#allocation2], [#allocation4]
        $region16: #{tpu_custom_call.1} parent=11 // pred_fallthru
          _
        // Predicated region
        $region17: #{tpu_custom_call.1} parent=11 // pred_check
          %p201 = pneg %p86
        $region18: #{tpu_custom_call.1} parent=11 // pred_check_branch
          %203 = sbr.rel (%p201) target = $region20
        $region19: #{tpu_custom_call.1} parent=11 // pred_region
          _
        $region20: #{tpu_custom_call.1} parent=11 // pred_fallthru
          _
        // Predicated region
        $region21: #{tpu_custom_call.1} parent=11 // pred_check
          %p204 = pneg %p107
        $region22: #{tpu_custom_call.1} parent=11 // pred_check_branch
          %206 = sbr.rel (%p204) target = $region24
        $region23: #{tpu_custom_call.1} parent=11 // pred_region
          _
        $region24: #{tpu_custom_call.1} parent=11 // pred_fallthru
          _
        // Predicated region
        $region25: #{tpu_custom_call.1} parent=11 // pred_check
          %p207 = pneg %p128
        $region26: #{tpu_custom_call.1} parent=11 // pred_check_branch
          %209 = sbr.rel (%p207) target = $region28
        $region27: #{tpu_custom_call.1} parent=11 // pred_region
          _
        $region28: #{tpu_custom_call.1} parent=11 // pred_fallthru
          _
      $region12: #{tpu_custom_call.1} parent=5 // pred_fallthru
        _
      %p210 = scmp.lt.s32.totalorder %s18, 2
      // Predicated region
      $region29: #{tpu_custom_call.1} parent=5 // pred_check
        %p211 = pneg %p210
      $region30: #{tpu_custom_call.1} parent=5 // pred_check_branch
        %213 = sbr.rel (%p211) target = $region32
      $region31: #{tpu_custom_call.1} parent=5 // pred_region
        // Predicated region
        $region33: #{tpu_custom_call.1} parent=31 // pred_check
          %p214 = pneg %p59
        $region34: #{tpu_custom_call.1} parent=31 // pred_check_branch
          %216 = sbr.rel (%p214) target = $region36
        $region35: #{tpu_custom_call.1} parent=31 // pred_region
          %p217 = scmp.lt.s32.totalorder %s18, 1
          %s218 = scalar_select %p217, %s18, 1
          %s219 = smul.addr %s218, 8
          %s220 = scalar_lea.vmem %s1, %s219
        $region36: #{tpu_custom_call.1} parent=31 // pred_fallthru
          _
      $region32: #{tpu_custom_call.1} parent=5 // pred_fallthru
        _
      %p221 = scmp.le.s32.totalorder 1, %s18
      %p222 = scmp.lt.s32.totalorder %s18, 3
      %p223 = pnand %p221, %p222
      %p224 = pneg %p223
      // Predicated region
      $region37: #{tpu_custom_call.1} parent=5 // pred_check
        _
      $region38: #{tpu_custom_call.1} parent=5 // pred_check_branch
        %226 = sbr.rel (%p223) target = $region40
      $region39: #{tpu_custom_call.1} parent=5 // pred_region
        %s227 = ssub.s32 %s18, 1
        // Predicated region
        $region41: #{tpu_custom_call.1} parent=39 // pred_check
          %p228 = pneg %p39
        $region42: #{tpu_custom_call.1} parent=39 // pred_check_branch
          %230 = sbr.rel (%p228) target = $region44
        $region43: #{tpu_custom_call.1} parent=39 // pred_region
          %231 = dma.done [#allocation4], 16
        $region44: #{tpu_custom_call.1} parent=39 // pred_fallthru
          _
        %232 = sfence
        %p233 = pneg %p39
        %p234 = pneg %p36
        %p235 = scmp.lt.s32.totalorder %s23, 1
        %s236 = scalar_select %p235, %s23, 1
        %s237 = smul.addr %s236, 8
        %s238 = scalar_lea.vmem %s1, %s237
        %p239 = pneg %p65
        %p240 = pneg %p62
        %p241 = pneg %p86
        %p242 = pneg %p83
        %p243 = pneg %p107
        %p244 = pneg %p104
        %p245 = pneg %p128
        %p246 = pneg %p125
        %p247 = pneg %p149
        %p248 = pneg %p146
        %p249 = pneg %p175
        %p250 = pneg %p172
        %s251 = sand.u32 %s162, 1
        %s252 = scalar_lea.sflag [#allocation7], %s251
        %s253 = sand.u32 %s162, 1
        %s254 = smul.addr %s253, 64
        %s255 = scalar_lea.vmem [#allocation6], %s254
        %p256 = scmp.lt.s32.totalorder %s23, 1
        %s257 = scalar_select %p256, %s23, 1
        %s258 = smul.addr %s257, 8
        %s259 = scalar_lea.vmem %s1, %s258
        %s260 = smul.u32 8, %s23
        %p261 = scmp.eq.s32.totalorder %s23, 0
        // Predicated region
        $region45: #{tpu_custom_call.1} parent=39 // pred_check
          %p262 = pneg %p261
        $region46: #{tpu_custom_call.1} parent=39 // pred_check_branch
          %264 = sbr.rel (%p262) target = $region48
        $region47: #{tpu_custom_call.1} parent=39 // pred_region
          %v265 = vld [vmem:[%s2] sm:$0xff]
          %v266 = vld [vmem:[%s2 + $0x8] sm:$0xff]
          %v267 = vld [vmem:[%s3] sm:$0xf]
          %vm268 = vcmask 31744
          %v270 = vsel %vm268, %v265, 0
          %v273 = vsel %vm268, %v266, 0
          %vm275 = vcmask 1043456
          %v277 = vsel %vm275, %v267, 0
          %279 = vmatprep.subr.mxu0 0.0
          %280 = vmatpush1.msra.mxu0 0.0
          %281 = vmatprep.subr.mxu0 0.0
          %282 = vmatpush1.msra.mxu0 0.0
          %283 = vmatprep.subr.mxu0 0.0
          %284 = vmatpush1.msra.mxu0 0.0
          %285 = vmatprep.subr.mxu0 0.0
          %286 = vmatpush1.msra.mxu0 0.0
          %287 = vmatprep.subr.mxu0 0.0
          %288 = vmatpush1.msra.mxu0 0.0
          %289 = vmatprep.subr.mxu0 0.0
          %290 = vmatpush1.msra.mxu0 0.0
          %291 = vmatprep.subr.mxu0 0.0
          %292 = vmatpush1.msra.mxu0 0.0
          %293 = vmatprep.subr.mxu0 0.0
          %294 = vmatpush1.msra.mxu0 0.0
          %295 = vmatprep.subr.mxu0 0.0
          %296 = vmatpush1.msra.mxu0 0.0
          %297 = vmatprep.subr.mxu0 0.0
          %298 = vmatpush1.msra.mxu0 0.0
          %299 = vmatprep.subr.mxu0 0.0
          %300 = vmatpush1.msra.mxu0 0.0
          %301 = vmatprep.subr.mxu0 0.0
          %302 = vmatpush1.msra.mxu0 0.0
          %303 = vmatprep.subr.mxu0 0.0
          %304 = vmatpush1.msra.mxu0 0.0
          %305 = vmatprep.subr.mxu0 0.0
          %306 = vmatpush1.msra.mxu0 0.0
          %307 = vmatprep.subr.mxu0 0.0
          %308 = vmatpush1.msra.mxu0 0.0
          %309 = vmatprep.subr.mxu0 0.0
          %310 = vmatpush1.msra.mxu0 %v277
          %311 = vmatprep.subr.mxu0 0.0
          %312 = vmatpush2.msra.mxu0 0.0
          %313 = vmatprep.subr.mxu0 0.0
          %314 = vmatpush2.msra.mxu0 0.0
          %315 = vmatprep.subr.mxu0 0.0
          %316 = vmatpush2.msra.mxu0 0.0
          %317 = vmatprep.subr.mxu0 0.0
          %318 = vmatpush2.msra.mxu0 0.0
          %319 = vmatprep.subr.mxu0 0.0
          %320 = vmatpush2.msra.mxu0 0.0
          %321 = vmatprep.subr.mxu0 0.0
          %322 = vmatpush2.msra.mxu0 0.0
          %323 = vmatprep.subr.mxu0 0.0
          %324 = vmatpush2.msra.mxu0 0.0
          %325 = vmatprep.subr.mxu0 0.0
          %326 = vmatpush2.msra.mxu0 0.0
          %327 = vmatprep.subr.mxu0 0.0
          %328 = vmatpush2.msra.mxu0 0.0
          %329 = vmatprep.subr.mxu0 0.0
          %330 = vmatpush2.msra.mxu0 0.0
          %331 = vmatprep.subr.mxu0 0.0
          %332 = vmatpush2.msra.mxu0 0.0
          %333 = vmatprep.subr.mxu0 0.0
          %334 = vmatpush2.msra.mxu0 0.0
          %335 = vmatprep.subr.mxu0 0.0
          %336 = vmatpush2.msra.mxu0 0.0
          %337 = vmatprep.subr.mxu0 0.0
          %338 = vmatpush2.msra.mxu0 0.0
          %339 = vmatprep.subr.mxu0 0.0
          %340 = vmatpush2.msra.mxu0 0.0
          %341 = vmatprep.subr.mxu0 0.0
          %342 = vmatpush2.msra.mxu0 0.0
          %343 = vmatprep.mubr.f32.mxu0 0.0
          %344 = vmatmul.mubr.f32.gmra.mxu0 %v270
          %v345 = vpop.f32.mrf.mxu0
          %v346 = vadd.f32 0.0, %v345
          %v347 = vpop.f32.mrf.mxu0
          %348 = vmatprep.mubr.f32.mxu0 0.0
          %349 = vmatmul.mubr.f32.gmra.mxu0 %v273
          %v350 = vpop.f32.mrf.mxu0
          %v351 = vadd.f32 0.0, %v350
          %v352 = vpop.f32.mrf.mxu0
          %353 = vdwg.mxu0
          %vm354 = vcmask 261120
          %355 = vst.msk [vmem:[#allocation5] sm:$0xff] %vm354, %v346
          %356 = vst.msk [vmem:[#allocation5 + $0x8] sm:$0xff] %vm354, %v351
        $region48: #{tpu_custom_call.1} parent=39 // pred_fallthru
          _
        %s357 = sld [smem:[#allocation2]]
        %s358 = sld [smem:[#allocation2 + $0x1]]
        %v359 = vld [vmem:[%s259] sm:$0xff]
        %v360 = vstv %s357
        %v361 = vsub.f32 %v359, %v360
        %v362 = vstv %s358
        %v363 = vmul.f32 %v361, %v362
        %v364 = vld [vmem:[%s4] sm:$0x1]
        %v365 = vlaneseq
        %v366 = vshrl.u32 %v365, 7
        %v367 = vsub.s32 0, %v366
        %v368 = vrot.slane %v363, %v367
        %370 = vbcast.lane.b32.xlu0 %v368, 256
        %v371 = vpop.permute.xlu0 %370
        %v372 = vlaneseq
        %v373 = vshrl.u32 %v372, 7
        %v374 = vsub.s32 1, %v373
        %v375 = vrot.slane %v363, %v374
        %377 = vbcast.lane.b32.xlu0 %v375, 256
        %v378 = vpop.permute.xlu0 %377
        %v379 = vlaneseq
        %v380 = vshrl.u32 %v379, 7
        %v381 = vsub.s32 2, %v380
        %v382 = vrot.slane %v363, %v381
        %384 = vbcast.lane.b32.xlu0 %v382, 256
        %v385 = vpop.permute.xlu0 %384
        %v386 = vlaneseq
        %v387 = vshrl.u32 %v386, 7
        %v388 = vsub.s32 3, %v387
        %v389 = vrot.slane %v363, %v388
        %391 = vbcast.lane.b32.xlu0 %v389, 256
        %v392 = vpop.permute.xlu0 %391
        %v393 = vlaneseq
        %v394 = vshrl.u32 %v393, 7
        %v395 = vsub.s32 4, %v394
        %v396 = vrot.slane %v363, %v395
        %398 = vbcast.lane.b32.xlu0 %v396, 256
        %v399 = vpop.permute.xlu0 %398
        %v400 = vlaneseq
        %v401 = vshrl.u32 %v400, 7
        %v402 = vsub.s32 5, %v401
        %v403 = vrot.slane %v363, %v402
        %405 = vbcast.lane.b32.xlu0 %v403, 256
        %v406 = vpop.permute.xlu0 %405
        %v407 = vlaneseq
        %v408 = vshrl.u32 %v407, 7
        %v409 = vsub.s32 6, %v408
        %v410 = vrot.slane %v363, %v409
        %412 = vbcast.lane.b32.xlu0 %v410, 256
        %v413 = vpop.permute.xlu0 %412
        %v414 = vlaneseq
        %v415 = vshrl.u32 %v414, 7
        %v416 = vsub.s32 7, %v415
        %v417 = vrot.slane %v363, %v416
        %419 = vbcast.lane.b32.xlu0 %v417, 256
        %v420 = vpop.permute.xlu0 %419
        %v422 = vlaneseq
        %v423 = vshrl.u32 %v422, 7
        %v424 = vsub.s32 0, %v423
        %v425 = vrot.slane %v364, %v424
        %v427 = vmul.f32 %v371, %v425
        %v428 = vmul.f32 %v378, %v425
        %v429 = vmul.f32 %v385, %v425
        %v430 = vmul.f32 %v392, %v425
        %v431 = vmul.f32 %v399, %v425
        %v432 = vmul.f32 %v406, %v425
        %v433 = vmul.f32 %v413, %v425
        %v434 = vmul.f32 %v420, %v425
        %vm435 = vcmask 261120
        %436 = vst.msk [vmem:[%s255] sm:$0xff] %vm435, %v427
        %437 = vst.msk [vmem:[%s255 + $0x8] sm:$0xff] %vm435, %v428
        %438 = vst.msk [vmem:[%s255 + $0x10] sm:$0xff] %vm435, %v429
        %439 = vst.msk [vmem:[%s255 + $0x18] sm:$0xff] %vm435, %v430
        %440 = vst.msk [vmem:[%s255 + $0x20] sm:$0xff] %vm435, %v431
        %441 = vst.msk [vmem:[%s255 + $0x28] sm:$0xff] %vm435, %v432
        %442 = vst.msk [vmem:[%s255 + $0x30] sm:$0xff] %vm435, %v433
        %443 = vst.msk [vmem:[%s255 + $0x38] sm:$0xff] %vm435, %v434
        %s444 = sand.u32 %s162, 1
        %s445 = scalar_lea.sflag [#allocation7], %s444
        %s446 = sand.u32 %s162, 1
        %s447 = smul.addr %s446, 64
        %s448 = scalar_lea.vmem [#allocation6], %s447
        // Predicated region
        $region49: #{tpu_custom_call.1} parent=39 // pred_check
          %p449 = pneg %p146
        $region50: #{tpu_custom_call.1} parent=39 // pred_check_branch
          %451 = sbr.rel (%p449) target = $region52
        $region51: #{tpu_custom_call.1} parent=39 // pred_region
          %s453 = ssub.s32 256, 256
          %454 = vsyncadd [#allocation3], %s453
          %s455 = sshll.u32 [#allocation5], 4
          %s456 = int_to_ptr.vmem [resolvable:$true] %s455
          %461 = dma.vmem_to_hbm [thread:$0]  %s456, 256, %s5, [#allocation3], 128, 128, 8
        $region52: #{tpu_custom_call.1} parent=39 // pred_fallthru
          _
        // Predicated region
        $region53: #{tpu_custom_call.1} parent=39 // pred_check
          %p462 = pneg %p172
        $region54: #{tpu_custom_call.1} parent=39 // pred_check_branch
          %464 = sbr.rel (%p462) target = $region56
        $region55: #{tpu_custom_call.1} parent=39 // pred_region
          %s465 = smul.u32 8, %s23
          %s467 = ssub.s32 1024, 1024
          %468 = vsyncadd %s445, %s467
          %s469 = smul.addr %s465, 128
          %s470 = scalar_lea.hbm %s6, %s469
          %s471 = sshll.u32 %s448, 4
          %s472 = int_to_ptr.vmem [resolvable:$true] %s471
          %477 = dma.vmem_to_hbm [thread:$0]  %s472, 1024, %s470, %s445, 128, 128, 8
        $region56: #{tpu_custom_call.1} parent=39 // pred_fallthru
          _
        // Predicated region
        $region57: #{tpu_custom_call.1} parent=39 // pred_check
          %p478 = pneg %p146
        $region58: #{tpu_custom_call.1} parent=39 // pred_check_branch
          %480 = sbr.rel (%p478) target = $region60
        $region59: #{tpu_custom_call.1} parent=39 // pred_region
          %481 = dma.done [#allocation3], 256
        $region60: #{tpu_custom_call.1} parent=39 // pred_fallthru
          _
      $region40: #{tpu_custom_call.1} parent=5 // pred_fallthru
        _
      %p482 = scmp.le.s32.totalorder 2, %s18
      // Predicated region
      $region61: #{tpu_custom_call.1} parent=5 // pred_check
        %p483 = pneg %p482
      $region62: #{tpu_custom_call.1} parent=5 // pred_check_branch
        %485 = sbr.rel (%p483) target = $region64
      $region63: #{tpu_custom_call.1} parent=5 // pred_region
        %s486 = ssub.s32 %s18, 2
        // Predicated region
        $region65: #{tpu_custom_call.1} parent=63 // pred_check
          %p487 = pneg %p178
        $region66: #{tpu_custom_call.1} parent=63 // pred_check_branch
          %489 = sbr.rel (%p487) target = $region68
        $region67: #{tpu_custom_call.1} parent=63 // pred_region
          %s490 = sand.u32 %s163, 1
          %s491 = scalar_lea.sflag [#allocation7], %s490
          %s492 = sand.u32 %s163, 1
          %s493 = smul.addr %s492, 64
          %s494 = scalar_lea.vmem [#allocation6], %s493
          %495 = dma.done %s491, 1024
        $region68: #{tpu_custom_call.1} parent=63 // pred_fallthru
          _
      $region64: #{tpu_custom_call.1} parent=5 // pred_fallthru
        _
    $region6: #{tpu_custom_call.1} parent=1 // loop_footer
      %s22 = sadd.s32 1, %s18
    $region7: #{tpu_custom_call.1} parent=1 // loop_footer_branch
      %17 = sbr.rel target = $region3
    $region8: #{tpu_custom_call.1} parent=1 // loop_exit
      _
    %496 = vsyncpa [#allocation3], 1
    %s497 = scalar_lea.sflag [#allocation3], 1
    %498 = vsyncpa %s497, 1
    %499 = vsyncpa [#allocation7], 1
    %s500 = scalar_lea.sflag [#allocation7], 1
    %501 = vsyncpa %s500, 1
    %502 = vsyncpa [#allocation4], 1
    %s503 = scalar_lea.sflag [#allocation4], 1
    %504 = vsyncpa %s503, 1

</llo_original>
